<compile_context>
chip_gen: v6e
topology: v6e:2x2x1
jax: 0.10.0
libtpu: 0.0.40
codegen_flags: <defaults>
</compile_context>

<pallas_src>
import math

import jax
import jax.numpy as jnp
from jax.experimental import pallas as pl
from jax.experimental.pallas import tpu as pltpu


def _token_embedding_kernel(x_ref, w_ref, o_ref):
    # x_ref: (BT, L, C)   batch tile, channels-last
    # w_ref: (3, C, TD)   conv taps [t-1, t, t+1] for this d_model tile
    # o_ref: (BT, L, TD)
    bt, L, _ = x_ref.shape
    w_m1 = w_ref[0]   # (C, TD) — hoisted: loaded once, reused for every batch element
    w_ctr = w_ref[1]
    w_p1 = w_ref[2]
    for b in range(bt):                      # static unroll over the small batch tile
        x = x_ref[b]                         # (L, C)
        x_m1 = pltpu.roll(x, 1, 0)           # x[(t-1) % L]  (circular)
        x_p1 = pltpu.roll(x, L - 1, 0)       # x[(t+1) % L]  (circular); L-1 == -1 mod L
        acc = jnp.dot(x_m1, w_m1, preferred_element_type=jnp.float32)
        acc = acc + jnp.dot(x, w_ctr, preferred_element_type=jnp.float32)
        acc = acc + jnp.dot(x_p1, w_p1, preferred_element_type=jnp.float32)
        o_ref[b] = acc.astype(o_ref.dtype)


def _choose_tiles(B, L, C, D, *, vmem_budget=20 * 1024 * 1024, itemsize=4):
    """Pick (batch_tile, d_tile).

    Policy: keep the whole weight resident (d_tile = D) when possible so it is fetched once;
    shrink the batch tile first (no extra HBM traffic), then the d tile (128-multiples only,
    keeps stores lane-dense), to respect the per-step VMEM budget; finally make sure there are
    >= 2 independent grid steps so dual-TensorCore chips (v7x) don't idle a core.
    """
    def step_bytes(bt, td):
        # double-buffered x, weight and output tiles per grid step
        return 2 * itemsize * (bt * L * C + 3 * C * td + bt * L * td)

    if D % 128 == 0:
        d_cands = [d for d in range(D, 0, -128) if D % d == 0]   # lane-dense 128-multiples
    else:
        d_cands = [D]                                            # must take the full dim

    bt = min(B, 8)
    td = d_cands[0]

    while step_bytes(bt, td) > vmem_budget:
        if bt > 1:
            bt //= 2                     # cheaper: no re-fetch introduced
        else:
            smaller_td = next((d for d in d_cands if d < td), None)
            if smaller_td is None:
                break                    # accept; vmem_limit_bytes is raised accordingly
            td = smaller_td

    # Guarantee >= 2 parallel grid steps (v7x has 2 TensorCores); harmless on v5e/v6e.
    if pl.cdiv(B, bt) * (D // td) < 2:
        smaller_td = next((d for d in d_cands if d < td), None)
        if smaller_td is not None:
            td = smaller_td
        elif bt > 1:
            bt = max(1, bt // 2)

    return bt, td


def token_embedding_forward(x, weight, *, out_dtype=None):
    """x: (B, L, c_in) float32; weight: (d_model, c_in, 3) float32 (PyTorch Conv1d layout).

    Returns (B, L, d_model) == TokenEmbedding.forward(x) of the PyTorch module.
    out_dtype=jnp.bfloat16 halves the dominant HBM write traffic (accumulation stays f32).
    """
    B, L, C = x.shape
    D = weight.shape[0]
    out_dtype = x.dtype if out_dtype is None else out_dtype

    # Stack taps leading: w_stacked[k, c, d] = weight[d, c, k]; tap k=0 pairs with x[t-1],
    # k=1 with x[t], k=2 with x[t+1] (cross-correlation with circular padding=1).
    w_stacked = jnp.transpose(weight, (2, 1, 0))   # (3, C, D)

    bt, td = _choose_tiles(B, L, C, D, itemsize=jnp.dtype(x.dtype).itemsize)
    n_b = pl.cdiv(B, bt)
    n_d = D // td

    in_isz = jnp.dtype(x.dtype).itemsize
    out_isz = jnp.dtype(out_dtype).itemsize

    # Actual traffic under grid=(n_d, n_b), batch innermost:
    #   weight: each d-tile fetched once -> 3*C*D; x: re-fetched per d-tile -> n_d * B*L*C.
    cost = pl.CostEstimate(
        flops=2 * B * L * (3 * C) * D,
        transcendentals=0,
        bytes_accessed=in_isz * (n_d * B * L * C + 3 * C * D) + out_isz * B * L * D,
    )

    # Explicit scoped-VMEM limit (v5e default 16MiB, v7x 32MiB): double-buffered tiles + headroom.
    vmem_need = 2 * (in_isz * bt * L * C + in_isz * 3 * C * td + out_isz * bt * L * td)
    vmem_limit = int(min(max(2 * vmem_need, 32 * 1024 * 1024), 64 * 1024 * 1024))

    out = pl.pallas_call(
        _token_embedding_kernel,
        out_shape=jax.ShapeDtypeStruct((B, L, D), out_dtype),
        grid_spec=pltpu.PrefetchScalarGridSpec(
            num_scalar_prefetch=0,
            grid=(n_d, n_b),                                   # batch innermost -> weight resident
            in_specs=[
                pl.BlockSpec((bt, L, C), lambda j, i: (i, 0, 0)),
                pl.BlockSpec((3, C, td), lambda j, i: (0, 0, j)),
            ],
            out_specs=pl.BlockSpec((bt, L, td), lambda j, i: (i, 0, j)),
        ),
        compiler_params=pltpu.CompilerParams(
            dimension_semantics=("parallel", "parallel"),
            vmem_limit_bytes=vmem_limit,
        ),
        cost_estimate=cost,
    )(x, w_stacked)
    return out


def _reference_forward(x, weight):
    """Pure-JAX reference of TokenEmbedding.forward with circular padding."""
    x_m1 = jnp.roll(x, 1, axis=1)
    x_p1 = jnp.roll(x, -1, axis=1)
    w0 = weight[:, :, 0].T
    w1 = weight[:, :, 1].T
    w2 = weight[:, :, 2].T
    return x_m1 @ w0 + x @ w1 + x_p1 @ w2


def make_weight(key, c_in, d_model):
    """Deterministic kaiming_normal_(mode='fan_in', nonlinearity='leaky_relu') equivalent."""
    fan_in = c_in * 3
    neg_slope = 0.01  # PyTorch default leaky_relu negative slope for the kaiming gain
    gain = math.sqrt(2.0 / (1.0 + neg_slope ** 2))
    std = gain / math.sqrt(fan_in)
    return std * jax.random.normal(key, (d_model, c_in, 3), dtype=jnp.float32)


if __name__ == "__main__":
    # (B, L, c_in, d_model) — small shapes that also exercise the tiled paths:
    configs = [
        (2, 16, 8, 32),    # tiny baseline; parallelism rule splits the batch into 2 steps
        (9, 24, 7, 256),   # partial batch tile (9 % 8 != 0), odd channel count, 128-multiple D
        (1, 16, 4, 256),   # small batch -> forced d_model split into 2 parallel d-tiles
    ]
    key = jax.random.PRNGKey(0)
    for (B, L, C_IN, D_MODEL) in configs:
        key, kx, kw = jax.random.split(key, 3)
        x = jax.random.normal(kx, (B, L, C_IN), dtype=jnp.float32)
        weight = make_weight(kw, C_IN, D_MODEL)

        out = jax.block_until_ready(token_embedding_forward(x, weight))
        ref = _reference_forward(x, weight)

        assert out.shape == (B, L, D_MODEL)
        assert jnp.allclose(out, ref, atol=1e-5, rtol=1e-5), f"mismatch at {(B, L, C_IN, D_MODEL)}"

    print("KERNEL_OK")
</pallas_src>

<mosaic_0001>
module attributes {stable_mosaic.version = 11 : i64} {
  func.func @_token_embedding_kernel(%arg0: i32, %arg1: i32, %arg2: memref<1x16x8xf32, #tpu.memory_space<vmem>>, %arg3: memref<3x8x32xf32, #tpu.memory_space<vmem>>, %arg4: memref<1x16x32xf32, #tpu.memory_space<vmem>>) attributes {dimension_semantics = [#tpu.dimension_semantics<parallel>, #tpu.dimension_semantics<parallel>], iteration_bounds = array<i64: 1, 2>, scalar_prefetch = 0 : i64, scratch_operands = 0 : i64, tpu.core_type = #tpu.core_type<tc>, window_params = [{transform_indices = @transform_0, window_bounds = array<i64: 1, 16, 8>}, {transform_indices = @transform_1, window_bounds = array<i64: 3, 8, 32>}, {transform_indices = @transform_2, window_bounds = array<i64: 1, 16, 32>}]} {
    %c0 = arith.constant 0 : index
    %c0_0 = arith.constant 0 : index
    %c0_1 = arith.constant 0 : index
    %0 = vector.load %arg3[%c0, %c0_0, %c0_1] : memref<3x8x32xf32, #tpu.memory_space<vmem>>, vector<1x8x32xf32>
    %1 = vector.shape_cast %0 : vector<1x8x32xf32> to vector<8x32xf32>
    %c1 = arith.constant 1 : index
    %c0_2 = arith.constant 0 : index
    %c0_3 = arith.constant 0 : index
    %2 = vector.load %arg3[%c1, %c0_2, %c0_3] : memref<3x8x32xf32, #tpu.memory_space<vmem>>, vector<1x8x32xf32>
    %3 = vector.shape_cast %2 : vector<1x8x32xf32> to vector<8x32xf32>
    %c2 = arith.constant 2 : index
    %c0_4 = arith.constant 0 : index
    %c0_5 = arith.constant 0 : index
    %4 = vector.load %arg3[%c2, %c0_4, %c0_5] : memref<3x8x32xf32, #tpu.memory_space<vmem>>, vector<1x8x32xf32>
    %5 = vector.shape_cast %4 : vector<1x8x32xf32> to vector<8x32xf32>
    %c0_6 = arith.constant 0 : index
    %c0_7 = arith.constant 0 : index
    %c0_8 = arith.constant 0 : index
    %6 = vector.load %arg2[%c0_6, %c0_7, %c0_8] : memref<1x16x8xf32, #tpu.memory_space<vmem>>, vector<1x16x8xf32>
    %7 = vector.shape_cast %6 : vector<1x16x8xf32> to vector<16x8xf32>
    %c1_i32 = arith.constant 1 : i32
    %8 = tpu.dynamic_rotate %7 by %c1_i32 dim 0 : vector<16x8xf32>, i32 -> vector<16x8xf32>
    %c15_i32 = arith.constant 15 : i32
    %9 = tpu.dynamic_rotate %7 by %c15_i32 dim 0 : vector<16x8xf32>, i32 -> vector<16x8xf32>
    %cst = arith.constant dense<0.000000e+00> : vector<16x32xf32>
    %10 = tpu.matmul %8, %1, %cst {dimension_numbers = #tpu.dot_dimension_numbers<[1], [0], [0], [1], [0, 0, 1, 1], [], []>} : vector<16x8xf32>, vector<8x32xf32>, vector<16x32xf32> -> vector<16x32xf32>
    %cst_9 = arith.constant dense<0.000000e+00> : vector<16x32xf32>
    %11 = tpu.matmul %7, %3, %cst_9 {dimension_numbers = #tpu.dot_dimension_numbers<[1], [0], [0], [1], [0, 0, 1, 1], [], []>} : vector<16x8xf32>, vector<8x32xf32>, vector<16x32xf32> -> vector<16x32xf32>
    %12 = arith.addf %10, %11 : vector<16x32xf32>
    %cst_10 = arith.constant dense<0.000000e+00> : vector<16x32xf32>
    %13 = tpu.matmul %9, %5, %cst_10 {dimension_numbers = #tpu.dot_dimension_numbers<[1], [0], [0], [1], [0, 0, 1, 1], [], []>} : vector<16x8xf32>, vector<8x32xf32>, vector<16x32xf32> -> vector<16x32xf32>
    %14 = arith.addf %12, %13 : vector<16x32xf32>
    %c0_11 = arith.constant 0 : index
    %c0_12 = arith.constant 0 : index
    %c0_13 = arith.constant 0 : index
    %15 = vector.load %arg4[%c0_11, %c0_12, %c0_13] : memref<1x16x32xf32, #tpu.memory_space<vmem>>, vector<1x16x32xf32>
    %16 = vector.shape_cast %15 : vector<1x16x32xf32> to vector<16x32xf32>
    %17 = vector.shape_cast %14 : vector<16x32xf32> to vector<1x16x32xf32>
    tpu.vector_store %arg4[%c0_11, %c0_12, %c0_13], %17 {strides = array<i32>} : memref<1x16x32xf32, #tpu.memory_space<vmem>>, vector<1x16x32xf32>,
    return
  }
  func.func @transform_0(%arg0: i32, %arg1: i32) -> (i32, i32, i32) {
    %c0_i32 = arith.constant 0 : i32
    %c0_i32_0 = arith.constant 0 : i32
    %c0_i32_1 = arith.constant 0 : i32
    return %arg1, %c0_i32, %c0_i32_0 : i32, i32, i32
  }
  func.func @transform_1(%arg0: i32, %arg1: i32) -> (i32, i32, i32) {
    %c0_i32 = arith.constant 0 : i32
    %c0_i32_0 = arith.constant 0 : i32
    %c0_i32_1 = arith.constant 0 : i32
    return %c0_i32, %c0_i32_0, %arg0 : i32, i32, i32
  }
  func.func @transform_2(%arg0: i32, %arg1: i32) -> (i32, i32, i32) {
    %c0_i32 = arith.constant 0 : i32
    %c0_i32_0 = arith.constant 0 : i32
    return %arg1, %c0_i32, %arg0 : i32, i32, i32
  }
}

</mosaic_0001>

<llo_original>
// kernel: tpu_custom_call.1
$region0: #{tpu_custom_call.1}
  #allocation0 [shape = 'u32[]', space=smem, size = 0x4, offset = 0x4, fixed_abs, tag = 'smem constant byte address 0x4 - core index']
  #allocation1 [shape = 'u32[144,128]{1,0:T(1,128)}', space=vmem, size = 0x12000, scoped, tag = 'internal scratch']
  %s0 = inlined_call_operand.vmem [shape: f32[2,16,8], index: 0, kind: input, shape index: {}]
  %s1 = inlined_call_operand.vmem [shape: f32[3,8,32], index: 1, kind: input, shape index: {}]
  %s2 = inlined_call_operand.hbm [shape: f32[2,16,32], index: 2, kind: output, shape index: {}]
  %s3 = sld [smem:[#allocation0]]
  $region41: #{tpu_custom_call.1} parent=0
    _
  %s5 = ssub.s32 1, %s3
  %s6 = scalar_select 0, %s5, %s3
  $region1: #{tpu_custom_call.1} parent=0
    #allocation2 [shape = 'u8[16384]{0}', space=vmem, size = 0x4000, scoped, tag = 'output window, operand 0']
    #allocation3 [shape = 's32[2]{0}', space=sflag, size = 0x8, scoped, tag = 'scoped memory for tpu_custom_call.1']
    %7 = vsyncpa [#allocation3], 0
    %s8 = scalar_lea.sflag [#allocation3], 1
    %9 = vsyncpa %s8, 0
    loop: start=0, step=1, limit=4
    $region2: #{tpu_custom_call.1} parent=1 // loop_pre_header
      _
    $region3: #{tpu_custom_call.1} parent=1 // loop_header
      %s11 = sphi 0, %s15
      %p12 = scmp.ge.s32.totalorder %s11, 4
      %s18 = sphi 0, %s30
      %s19 = sphi 0, %s26
      %s20 = sphi 0, %s18
      %s21 = sphi 0, %s19
      %s22 = sphi 0, %s20
      %s23 = sphi 0, %s21
      %s33 = sphi 0, %s35
      %s36 = sphi 0, %s33
      %s37 = sphi 0, %s36
      %s53 = sphi 0, %s37
      %s59 = sphi 0, %s61
      %s62 = sphi 0, %s59
      %s63 = sphi 0, %s62
      %s79 = sphi 0, %s63
      %s87 = sphi 0, %s89
      %s90 = sphi 0, %s87
      %s91 = sphi 0, %s90
      %s107 = sphi 0, %s91
    $region4: #{tpu_custom_call.1} parent=1 // loop_header_branch
      %14 = sbr.rel (%p12) target = $region8
    $region5: #{tpu_custom_call.1} parent=1 // loop_body
      %s16 = ssub.s32 %s11, 1
      %s17 = ssub.s32 %s11, 2
      %s24 = sadd.s32 1, %s19
      %p25 = scmp.ge.s32.totalorder %s24, 2
      %s26 = scalar_select %p25, 0, %s24
      %s27 = sadd.s32 1, %s18
      %s28 = scalar_select %p25, %s27, %s18
      %p29 = scmp.ge.s32.totalorder %s28, 1
      %s30 = scalar_select %p29, 0, %s28
      %s31 = ssub.s32 %s19, %s26
      %p32 = scmp.eq.s32.totalorder %s31, 0
      %s34 = sadd.s32 %s33, 1
      %s35 = scalar_select %p32, %s33, %s34
      %p38 = pneg %p32
      %p39 = scmp.eq.s32.totalorder %s11, 1
      %p40 = por %p38, %p39
      %p41 = scmp.ne.s32.totalorder %s33, %s36
      %p42 = scmp.eq.s32.totalorder %s11, 0
      %p43 = por %p41, %p42
      %p44 = scmp.ne.s32.totalorder %s33, %s36
      %p45 = scmp.eq.s32.totalorder %s16, 1
      %p46 = por %p44, %p45
      %p47 = scmp.ne.s32.totalorder %s36, %s37
      %p48 = scmp.eq.s32.totalorder %s16, 0
      %p49 = por %p47, %p48
      %p50 = scmp.ne.s32.totalorder %s36, %s37
      %p51 = scmp.eq.s32.totalorder %s17, 1
      %p52 = por %p50, %p51
      %p54 = scmp.ne.s32.totalorder %s37, %s53
      %p55 = scmp.eq.s32.totalorder %s17, 0
      %p56 = por %p54, %p55
      %s57 = ssub.s32 %s18, %s30
      %p58 = scmp.eq.s32.totalorder %s57, 0
      %s60 = sadd.s32 %s59, 1
      %s61 = scalar_select %p58, %s59, %s60
      %p64 = pneg %p58
      %p65 = scmp.eq.s32.totalorder %s11, 1
      %p66 = por %p64, %p65
      %p67 = scmp.ne.s32.totalorder %s59, %s62
      %p68 = scmp.eq.s32.totalorder %s11, 0
      %p69 = por %p67, %p68
      %p70 = scmp.ne.s32.totalorder %s59, %s62
      %p71 = scmp.eq.s32.totalorder %s16, 1
      %p72 = por %p70, %p71
      %p73 = scmp.ne.s32.totalorder %s62, %s63
      %p74 = scmp.eq.s32.totalorder %s16, 0
      %p75 = por %p73, %p74
      %p76 = scmp.ne.s32.totalorder %s62, %s63
      %p77 = scmp.eq.s32.totalorder %s17, 1
      %p78 = por %p76, %p77
      %p80 = scmp.ne.s32.totalorder %s63, %s79
      %p81 = scmp.eq.s32.totalorder %s17, 0
      %p82 = por %p80, %p81
      %s83 = ssub.s32 %s19, %s26
      %s84 = ssub.s32 %s18, %s30
      %s85 = sor.u32 %s83, %s84
      %p86 = scmp.eq.s32.totalorder %s85, 0
      %s88 = sadd.s32 %s87, 1
      %s89 = scalar_select %p86, %s87, %s88
      %p92 = pneg %p86
      %p93 = scmp.eq.s32.totalorder %s11, 1
      %p94 = por %p92, %p93
      %p95 = scmp.ne.s32.totalorder %s87, %s90
      %p96 = scmp.eq.s32.totalorder %s11, 0
      %p97 = por %p95, %p96
      %p98 = scmp.ne.s32.totalorder %s87, %s90
      %p99 = scmp.eq.s32.totalorder %s16, 1
      %p100 = por %p98, %p99
      %p101 = scmp.ne.s32.totalorder %s90, %s91
      %p102 = scmp.eq.s32.totalorder %s16, 0
      %p103 = por %p101, %p102
      %p104 = scmp.ne.s32.totalorder %s90, %s91
      %p105 = scmp.eq.s32.totalorder %s17, 1
      %p106 = por %p104, %p105
      %p108 = scmp.ne.s32.totalorder %s91, %s107
      %p109 = scmp.eq.s32.totalorder %s17, 0
      %p110 = por %p108, %p109
      %p111 = scmp.le.s32.totalorder 1, %s11
      %p112 = scmp.lt.s32.totalorder %s11, 3
      %p113 = pnand %p111, %p112
      %p114 = pneg %p113
      // Predicated region
      $region9: #{tpu_custom_call.1} parent=5 // pred_check
        _
      $region10: #{tpu_custom_call.1} parent=5 // pred_check_branch
        %116 = sbr.rel (%p113) target = $region12
      $region11: #{tpu_custom_call.1} parent=5 // pred_region
        %s117 = ssub.s32 %s11, 1
        // Predicated region
        $region13: #{tpu_custom_call.1} parent=11 // pred_check
          %p118 = pneg %p75
        $region14: #{tpu_custom_call.1} parent=11 // pred_check_branch
          %120 = sbr.rel (%p118) target = $region16
        $region15: #{tpu_custom_call.1} parent=11 // pred_region
          %p121 = scmp.lt.s32.totalorder %s20, 0
          %s122 = scalar_select %p121, %s20, 0
          %s123 = smul.addr %s122, 8
          %s124 = scalar_lea.vmem %s1, %s123
        $region16: #{tpu_custom_call.1} parent=11 // pred_fallthru
          _
      $region12: #{tpu_custom_call.1} parent=5 // pred_fallthru
        _
      %p125 = scmp.lt.s32.totalorder %s11, 2
      // Predicated region
      $region17: #{tpu_custom_call.1} parent=5 // pred_check
        %p126 = pneg %p125
      $region18: #{tpu_custom_call.1} parent=5 // pred_check_branch
        %128 = sbr.rel (%p126) target = $region20
      $region19: #{tpu_custom_call.1} parent=5 // pred_region
        // Predicated region
        $region21: #{tpu_custom_call.1} parent=19 // pred_check
          %p129 = pneg %p43
        $region22: #{tpu_custom_call.1} parent=19 // pred_check_branch
          %131 = sbr.rel (%p129) target = $region24
        $region23: #{tpu_custom_call.1} parent=19 // pred_region
          %p132 = scmp.lt.s32.totalorder %s19, 1
          %s133 = scalar_select %p132, %s19, 1
          %s134 = smul.addr %s133, 2
          %s135 = smul.addr %s134, 8
          %s136 = scalar_lea.vmem %s0, %s135
        $region24: #{tpu_custom_call.1} parent=19 // pred_fallthru
          _
      $region20: #{tpu_custom_call.1} parent=5 // pred_fallthru
        _
      %p137 = scmp.le.s32.totalorder 1, %s11
      %p138 = scmp.lt.s32.totalorder %s11, 3
      %p139 = pnand %p137, %p138
      %p140 = pneg %p139
      // Predicated region
      $region25: #{tpu_custom_call.1} parent=5 // pred_check
        _
      $region26: #{tpu_custom_call.1} parent=5 // pred_check_branch
        %142 = sbr.rel (%p139) target = $region28
      $region27: #{tpu_custom_call.1} parent=5 // pred_region
        %s143 = ssub.s32 %s11, 1
        %p144 = scmp.lt.s32.totalorder %s21, 1
        %s145 = scalar_select %p144, %s21, 1
        %s146 = smul.addr %s145, 2
        %s147 = smul.addr %s146, 8
        %s148 = scalar_lea.vmem %s0, %s147
        %p149 = pneg %p49
        %p150 = pneg %p46
        %p151 = scmp.lt.s32.totalorder %s20, 0
        %s152 = scalar_select %p151, %s20, 0
        %s153 = smul.addr %s152, 8
        %s154 = scalar_lea.vmem %s1, %s153
        %p155 = pneg %p75
        %p156 = pneg %p72
        %p157 = pneg %p103
        %p158 = pneg %p100
        %s159 = sand.u32 %s90, 1
        %s160 = scalar_lea.sflag [#allocation3], %s159
        %s161 = sand.u32 %s90, 1
        %s162 = smul.addr %s161, 16
        %s163 = scalar_lea.vmem [#allocation2], %s162
        %p164 = scmp.lt.s32.totalorder %s21, 1
        %s165 = scalar_select %p164, %s21, 1
        %s166 = smul.addr %s165, 2
        %s167 = smul.addr %s166, 8
        %s168 = scalar_lea.vmem %s0, %s167
        %p169 = scmp.lt.s32.totalorder %s20, 0
        %s170 = scalar_select %p169, %s20, 0
        %s171 = smul.addr %s170, 8
        %s172 = scalar_lea.vmem %s1, %s171
        %v173 = vld [vmem:[%s172] sm:$0xff]
        %s174 = scalar_lea.vmem %s172, 8
        %v175 = vld [vmem:[%s174] sm:$0xff]
        %s176 = scalar_lea.vmem %s172, 16
        %v177 = vld [vmem:[%s176] sm:$0xff]
        %v178 = vld [vmem:[%s168] sm:$0xff]
        %v179 = vld [vmem:[%s168 + $0x8] sm:$0xff]
        %v180 = vrot.slane %v178, 7
        %v181 = vrot.slane %v179, 7
        %v182 = vlaneseq
        %v183 = vshrl.u32 %v182, 7
        %vm184 = vcmp.lt.s32.totalorder %v183, 1
        %v185 = vsel %vm184, %v180, %v181
        %v186 = vsel %vm184, %v181, %v180
        %v187 = vrot.slane %v178, 1
        %v188 = vrot.slane %v179, 1
        %vm189 = vcmp.lt.s32.totalorder %v183, 7
        %v190 = vsel %vm189, %v187, %v188
        %v191 = vsel %vm189, %v188, %v187
        %vm192 = vcmask 64512
        %v194 = vsel %vm192, %v178, 0
        %v197 = vsel %vm192, %v179, 0
        %199 = vmatprep.subr.mxu0 0.0
        %200 = vmatpush1.msra.mxu0 0.0
        %201 = vmatprep.subr.mxu0 0.0
        %202 = vmatpush1.msra.mxu0 0.0
        %203 = vmatprep.subr.mxu0 0.0
        %204 = vmatpush1.msra.mxu0 0.0
        %205 = vmatprep.subr.mxu0 0.0
        %206 = vmatpush1.msra.mxu0 0.0
        %207 = vmatprep.subr.mxu0 0.0
        %208 = vmatpush1.msra.mxu0 0.0
        %209 = vmatprep.subr.mxu0 0.0
        %210 = vmatpush1.msra.mxu0 0.0
        %211 = vmatprep.subr.mxu0 0.0
        %212 = vmatpush1.msra.mxu0 0.0
        %213 = vmatprep.subr.mxu0 0.0
        %214 = vmatpush1.msra.mxu0 0.0
        %215 = vmatprep.subr.mxu0 0.0
        %216 = vmatpush1.msra.mxu0 0.0
        %217 = vmatprep.subr.mxu0 0.0
        %218 = vmatpush1.msra.mxu0 0.0
        %219 = vmatprep.subr.mxu0 0.0
        %220 = vmatpush1.msra.mxu0 0.0
        %221 = vmatprep.subr.mxu0 0.0
        %222 = vmatpush1.msra.mxu0 0.0
        %223 = vmatprep.subr.mxu0 0.0
        %224 = vmatpush1.msra.mxu0 0.0
        %225 = vmatprep.subr.mxu0 0.0
        %226 = vmatpush1.msra.mxu0 0.0
        %227 = vmatprep.subr.mxu0 0.0
        %228 = vmatpush1.msra.mxu0 0.0
        %229 = vmatprep.subr.mxu0 0.0
        %230 = vmatpush1.msra.mxu0 %v175
        %231 = vmatprep.subr.mxu0 0.0
        %232 = vmatpush2.msra.mxu0 0.0
        %233 = vmatprep.subr.mxu0 0.0
        %234 = vmatpush2.msra.mxu0 0.0
        %235 = vmatprep.subr.mxu0 0.0
        %236 = vmatpush2.msra.mxu0 0.0
        %237 = vmatprep.subr.mxu0 0.0
        %238 = vmatpush2.msra.mxu0 0.0
        %239 = vmatprep.subr.mxu0 0.0
        %240 = vmatpush2.msra.mxu0 0.0
        %241 = vmatprep.subr.mxu0 0.0
        %242 = vmatpush2.msra.mxu0 0.0
        %243 = vmatprep.subr.mxu0 0.0
        %244 = vmatpush2.msra.mxu0 0.0
        %245 = vmatprep.subr.mxu0 0.0
        %246 = vmatpush2.msra.mxu0 0.0
        %247 = vmatprep.subr.mxu0 0.0
        %248 = vmatpush2.msra.mxu0 0.0
        %249 = vmatprep.subr.mxu0 0.0
        %250 = vmatpush2.msra.mxu0 0.0
        %251 = vmatprep.subr.mxu0 0.0
        %252 = vmatpush2.msra.mxu0 0.0
        %253 = vmatprep.subr.mxu0 0.0
        %254 = vmatpush2.msra.mxu0 0.0
        %255 = vmatprep.subr.mxu0 0.0
        %256 = vmatpush2.msra.mxu0 0.0
        %257 = vmatprep.subr.mxu0 0.0
        %258 = vmatpush2.msra.mxu0 0.0
        %259 = vmatprep.subr.mxu0 0.0
        %260 = vmatpush2.msra.mxu0 0.0
        %261 = vmatprep.subr.mxu0 0.0
        %262 = vmatpush2.msra.mxu0 0.0
        %263 = vmatprep.mubr.f32.mxu0 0.0
        %264 = vmatmul.mubr.f32.gmra.mxu0 %v194
        %v265 = vpop.f32.mrf.mxu0
        %v266 = vadd.f32 0.0, %v265
        %v267 = vpop.f32.mrf.mxu0
        %268 = vmatprep.mubr.f32.mxu0 0.0
        %269 = vmatmul.mubr.f32.gmra.mxu0 %v197
        %v270 = vpop.f32.mrf.mxu0
        %v271 = vadd.f32 0.0, %v270
        %v272 = vpop.f32.mrf.mxu0
        %273 = vdwg.mxu0
        %v275 = vsel %vm192, %v186, 0
        %v278 = vsel %vm192, %v185, 0
        %280 = vmatprep.subr.mxu0 0.0
        %281 = vmatpush1.msra.mxu0 0.0
        %282 = vmatprep.subr.mxu0 0.0
        %283 = vmatpush1.msra.mxu0 0.0
        %284 = vmatprep.subr.mxu0 0.0
        %285 = vmatpush1.msra.mxu0 0.0
        %286 = vmatprep.subr.mxu0 0.0
        %287 = vmatpush1.msra.mxu0 0.0
        %288 = vmatprep.subr.mxu0 0.0
        %289 = vmatpush1.msra.mxu0 0.0
        %290 = vmatprep.subr.mxu0 0.0
        %291 = vmatpush1.msra.mxu0 0.0
        %292 = vmatprep.subr.mxu0 0.0
        %293 = vmatpush1.msra.mxu0 0.0
        %294 = vmatprep.subr.mxu0 0.0
        %295 = vmatpush1.msra.mxu0 0.0
        %296 = vmatprep.subr.mxu0 0.0
        %297 = vmatpush1.msra.mxu0 0.0
        %298 = vmatprep.subr.mxu0 0.0
        %299 = vmatpush1.msra.mxu0 0.0
        %300 = vmatprep.subr.mxu0 0.0
        %301 = vmatpush1.msra.mxu0 0.0
        %302 = vmatprep.subr.mxu0 0.0
        %303 = vmatpush1.msra.mxu0 0.0
        %304 = vmatprep.subr.mxu0 0.0
        %305 = vmatpush1.msra.mxu0 0.0
        %306 = vmatprep.subr.mxu0 0.0
        %307 = vmatpush1.msra.mxu0 0.0
        %308 = vmatprep.subr.mxu0 0.0
        %309 = vmatpush1.msra.mxu0 0.0
        %310 = vmatprep.subr.mxu0 0.0
        %311 = vmatpush1.msra.mxu0 %v173
        %312 = vmatprep.subr.mxu0 0.0
        %313 = vmatpush2.msra.mxu0 0.0
        %314 = vmatprep.subr.mxu0 0.0
        %315 = vmatpush2.msra.mxu0 0.0
        %316 = vmatprep.subr.mxu0 0.0
        %317 = vmatpush2.msra.mxu0 0.0
        %318 = vmatprep.subr.mxu0 0.0
        %319 = vmatpush2.msra.mxu0 0.0
        %320 = vmatprep.subr.mxu0 0.0
        %321 = vmatpush2.msra.mxu0 0.0
        %322 = vmatprep.subr.mxu0 0.0
        %323 = vmatpush2.msra.mxu0 0.0
        %324 = vmatprep.subr.mxu0 0.0
        %325 = vmatpush2.msra.mxu0 0.0
        %326 = vmatprep.subr.mxu0 0.0
        %327 = vmatpush2.msra.mxu0 0.0
        %328 = vmatprep.subr.mxu0 0.0
        %329 = vmatpush2.msra.mxu0 0.0
        %330 = vmatprep.subr.mxu0 0.0
        %331 = vmatpush2.msra.mxu0 0.0
        %332 = vmatprep.subr.mxu0 0.0
        %333 = vmatpush2.msra.mxu0 0.0
        %334 = vmatprep.subr.mxu0 0.0
        %335 = vmatpush2.msra.mxu0 0.0
        %336 = vmatprep.subr.mxu0 0.0
        %337 = vmatpush2.msra.mxu0 0.0
        %338 = vmatprep.subr.mxu0 0.0
        %339 = vmatpush2.msra.mxu0 0.0
        %340 = vmatprep.subr.mxu0 0.0
        %341 = vmatpush2.msra.mxu0 0.0
        %342 = vmatprep.subr.mxu0 0.0
        %343 = vmatpush2.msra.mxu0 0.0
        %344 = vmatprep.mubr.f32.mxu0 0.0
        %345 = vmatmul.mubr.f32.gmra.mxu0 %v275
        %v346 = vpop.f32.mrf.mxu0
        %v347 = vadd.f32 %v266, %v346
        %v348 = vpop.f32.mrf.mxu0
        %349 = vmatprep.mubr.f32.mxu0 0.0
        %350 = vmatmul.mubr.f32.gmra.mxu0 %v278
        %v351 = vpop.f32.mrf.mxu0
        %v352 = vadd.f32 %v271, %v351
        %v353 = vpop.f32.mrf.mxu0
        %354 = vdwg.mxu0
        %v356 = vsel %vm192, %v190, 0
        %v359 = vsel %vm192, %v191, 0
        %361 = vmatprep.subr.mxu0 0.0
        %362 = vmatpush1.msra.mxu0 0.0
        %363 = vmatprep.subr.mxu0 0.0
        %364 = vmatpush1.msra.mxu0 0.0
        %365 = vmatprep.subr.mxu0 0.0
        %366 = vmatpush1.msra.mxu0 0.0
        %367 = vmatprep.subr.mxu0 0.0
        %368 = vmatpush1.msra.mxu0 0.0
        %369 = vmatprep.subr.mxu0 0.0
        %370 = vmatpush1.msra.mxu0 0.0
        %371 = vmatprep.subr.mxu0 0.0
        %372 = vmatpush1.msra.mxu0 0.0
        %373 = vmatprep.subr.mxu0 0.0
        %374 = vmatpush1.msra.mxu0 0.0
        %375 = vmatprep.subr.mxu0 0.0
        %376 = vmatpush1.msra.mxu0 0.0
        %377 = vmatprep.subr.mxu0 0.0
        %378 = vmatpush1.msra.mxu0 0.0
        %379 = vmatprep.subr.mxu0 0.0
        %380 = vmatpush1.msra.mxu0 0.0
        %381 = vmatprep.subr.mxu0 0.0
        %382 = vmatpush1.msra.mxu0 0.0
        %383 = vmatprep.subr.mxu0 0.0
        %384 = vmatpush1.msra.mxu0 0.0
        %385 = vmatprep.subr.mxu0 0.0
        %386 = vmatpush1.msra.mxu0 0.0
        %387 = vmatprep.subr.mxu0 0.0
        %388 = vmatpush1.msra.mxu0 0.0
        %389 = vmatprep.subr.mxu0 0.0
        %390 = vmatpush1.msra.mxu0 0.0
        %391 = vmatprep.subr.mxu0 0.0
        %392 = vmatpush1.msra.mxu0 %v177
        %393 = vmatprep.subr.mxu0 0.0
        %394 = vmatpush2.msra.mxu0 0.0
        %395 = vmatprep.subr.mxu0 0.0
        %396 = vmatpush2.msra.mxu0 0.0
        %397 = vmatprep.subr.mxu0 0.0
        %398 = vmatpush2.msra.mxu0 0.0
        %399 = vmatprep.subr.mxu0 0.0
        %400 = vmatpush2.msra.mxu0 0.0
        %401 = vmatprep.subr.mxu0 0.0
        %402 = vmatpush2.msra.mxu0 0.0
        %403 = vmatprep.subr.mxu0 0.0
        %404 = vmatpush2.msra.mxu0 0.0
        %405 = vmatprep.subr.mxu0 0.0
        %406 = vmatpush2.msra.mxu0 0.0
        %407 = vmatprep.subr.mxu0 0.0
        %408 = vmatpush2.msra.mxu0 0.0
        %409 = vmatprep.subr.mxu0 0.0
        %410 = vmatpush2.msra.mxu0 0.0
        %411 = vmatprep.subr.mxu0 0.0
        %412 = vmatpush2.msra.mxu0 0.0
        %413 = vmatprep.subr.mxu0 0.0
        %414 = vmatpush2.msra.mxu0 0.0
        %415 = vmatprep.subr.mxu0 0.0
        %416 = vmatpush2.msra.mxu0 0.0
        %417 = vmatprep.subr.mxu0 0.0
        %418 = vmatpush2.msra.mxu0 0.0
        %419 = vmatprep.subr.mxu0 0.0
        %420 = vmatpush2.msra.mxu0 0.0
        %421 = vmatprep.subr.mxu0 0.0
        %422 = vmatpush2.msra.mxu0 0.0
        %423 = vmatprep.subr.mxu0 0.0
        %424 = vmatpush2.msra.mxu0 0.0
        %425 = vmatprep.mubr.f32.mxu0 0.0
        %426 = vmatmul.mubr.f32.gmra.mxu0 %v356
        %v427 = vpop.f32.mrf.mxu0
        %v428 = vadd.f32 0.0, %v427
        %v429 = vpop.f32.mrf.mxu0
        %430 = vmatprep.mubr.f32.mxu0 0.0
        %431 = vmatmul.mubr.f32.gmra.mxu0 %v359
        %v432 = vpop.f32.mrf.mxu0
        %v433 = vadd.f32 0.0, %v432
        %v434 = vpop.f32.mrf.mxu0
        %435 = vdwg.mxu0
        %v436 = vadd.f32 %v347, %v428
        %v437 = vadd.f32 %v352, %v433
        %vm438 = vcmask 261120
        %439 = vst.msk [vmem:[%s163] sm:$0xff] %vm438, %v436
        %440 = vst.msk [vmem:[%s163 + $0x8] sm:$0xff] %vm438, %v437
        %s441 = sand.u32 %s90, 1
        %s442 = scalar_lea.sflag [#allocation3], %s441
        %s443 = sand.u32 %s90, 1
        %s444 = smul.addr %s443, 16
        %s445 = scalar_lea.vmem [#allocation2], %s444
        // Predicated region
        $region29: #{tpu_custom_call.1} parent=27 // pred_check
          %p446 = pneg %p100
        $region30: #{tpu_custom_call.1} parent=27 // pred_check_branch
          %448 = sbr.rel (%p446) target = $region32
        $region31: #{tpu_custom_call.1} parent=27 // pred_region
          %s450 = ssub.s32 256, 256
          %451 = vsyncadd %s442, %s450
          %s452 = smul.addr %s21, 2
          %s453 = sadd.s32 %s20, %s452
          %s454 = smul.addr %s453, 128
          %s455 = scalar_lea.hbm %s2, %s454
          %s456 = sshll.u32 %s445, 4
          %s457 = int_to_ptr.vmem [resolvable:$true] %s456
          %462 = dma.vmem_to_hbm [thread:$0]  %s457, 256, %s455, %s442, 128, 128, 8
        $region32: #{tpu_custom_call.1} parent=27 // pred_fallthru
          _
      $region28: #{tpu_custom_call.1} parent=5 // pred_fallthru
        _
      %p463 = scmp.le.s32.totalorder 2, %s11
      // Predicated region
      $region33: #{tpu_custom_call.1} parent=5 // pred_check
        %p464 = pneg %p463
      $region34: #{tpu_custom_call.1} parent=5 // pred_check_branch
        %466 = sbr.rel (%p464) target = $region36
      $region35: #{tpu_custom_call.1} parent=5 // pred_region
        %s467 = ssub.s32 %s11, 2
        // Predicated region
        $region37: #{tpu_custom_call.1} parent=35 // pred_check
          %p468 = pneg %p106
        $region38: #{tpu_custom_call.1} parent=35 // pred_check_branch
          %470 = sbr.rel (%p468) target = $region40
        $region39: #{tpu_custom_call.1} parent=35 // pred_region
          %s471 = sand.u32 %s91, 1
          %s472 = scalar_lea.sflag [#allocation3], %s471
          %s473 = sand.u32 %s91, 1
          %s474 = smul.addr %s473, 16
          %s475 = scalar_lea.vmem [#allocation2], %s474
          %476 = dma.done %s472, 256
        $region40: #{tpu_custom_call.1} parent=35 // pred_fallthru
          _
      $region36: #{tpu_custom_call.1} parent=5 // pred_fallthru
        _
    $region6: #{tpu_custom_call.1} parent=1 // loop_footer
      %s15 = sadd.s32 1, %s11
    $region7: #{tpu_custom_call.1} parent=1 // loop_footer_branch
      %10 = sbr.rel target = $region3
    $region8: #{tpu_custom_call.1} parent=1 // loop_exit
      _
    %477 = vsyncpa [#allocation3], 1
    %s478 = scalar_lea.sflag [#allocation3], 1
    %479 = vsyncpa %s478, 1

</llo_original>
